<compile_context>
chip_gen: v6e
topology: v6e:2x2x1
jax: 0.10.0
libtpu: 0.0.40
codegen_flags: <defaults>
</compile_context>

<pallas_src>
import functools

import jax
import jax.numpy as jnp
from jax.experimental import pallas as pl
from jax.experimental.pallas import tpu as pltpu


D_IN = 32
H = 64
N_SOL = 16
N_INEQ = 8
N_EQ = 4
N_HEAD = N_SOL + N_INEQ + N_EQ  # 28


def _kkt_kernel(x_ref,
                w1_ref, b1_ref, w2_ref, b2_ref,
                wh_ref, bh_ref,
                head_ref):
    # In-kernel bf16 cast of the f32 input tile (cheap VPU pack, hidden by pipeline).
    x = x_ref[...].astype(jnp.bfloat16)

    # shared_layers: Linear -> ReLU -> Linear -> ReLU  (bf16 operands, f32 accumulation)
    h1 = jnp.dot(x, w1_ref[...], preferred_element_type=jnp.float32) + b1_ref[...]
    h1 = jnp.maximum(h1, 0.0).astype(jnp.bfloat16)
    h2 = jnp.dot(h1, w2_ref[...], preferred_element_type=jnp.float32) + b2_ref[...]
    shared = jnp.maximum(h2, 0.0).astype(jnp.bfloat16)

    # fused heads: one MXU launch over the concatenated (H, N_SOL+N_INEQ+N_EQ) weight
    y = jnp.dot(shared, wh_ref[...], preferred_element_type=jnp.float32) + bh_ref[...]

    # per-head activation: tanh on the solution lanes, ReLU on the inequality lanes,
    # identity on the equality lanes (lane-mask select avoids sub-lane slicing; the
    # extra tanh lanes are free EUP work here).
    lane = jax.lax.broadcasted_iota(jnp.int32, y.shape, dimension=1)
    act = jnp.where(lane < N_SOL, jnp.tanh(y),
                    jnp.where(lane < N_SOL + N_INEQ, jnp.maximum(y, 0.0), y))
    head_ref[...] = act.astype(head_ref.dtype)


def pack_params(params):
    """One-time weight packing: bf16 casts + head concatenation, hoisted out of the
    per-call path (several tiny cast/concat launches removed from every forward)."""
    return dict(
        w1=params["w1"].astype(jnp.bfloat16),
        b1=params["b1"],
        w2=params["w2"].astype(jnp.bfloat16),
        b2=params["b2"],
        wh=jnp.concatenate(
            [params["ws"], params["wi"], params["we"]], axis=1).astype(jnp.bfloat16),
        bh=jnp.concatenate([params["bs"], params["bi"], params["be"]], axis=1),
    )


@functools.partial(jax.jit, static_argnames=("batch_tile", "out_dtype"))
def kkt_net_forward(x, packed, batch_tile=2048, out_dtype=jnp.bfloat16):
    """Returns the fused head slab (B, N_HEAD) = [sol | ineq_mult | eq_mult].

    The slab is returned unsplit so the consumer (or a fused downstream op) decides
    whether/where to slice it — avoids extra HBM passes at the jit boundary.
    """
    B = x.shape[0]
    assert B % batch_tile == 0, (B, batch_tile)
    grid = (B // batch_tile,)

    def rep(shape):
        # weight / bias block: full array, replicated across batch tiles
        return pl.BlockSpec(shape, lambda i: (0,) * len(shape))

    in_specs = [
        pl.BlockSpec((batch_tile, D_IN), lambda i: (i, 0)),   # x (f32, cast in-kernel)
        rep((D_IN, H)), rep((1, H)),                          # W1 (bf16), b1 (f32)
        rep((H, H)),    rep((1, H)),                          # W2 (bf16), b2 (f32)
        rep((H, N_HEAD)), rep((1, N_HEAD)),                   # fused head W (bf16), b (f32)
    ]
    out_specs = pl.BlockSpec((batch_tile, N_HEAD), lambda i: (i, 0))
    out_shape = jax.ShapeDtypeStruct((B, N_HEAD), out_dtype)

    # Advisory cost estimate for the XLA scheduler around the custom call.
    out_bytes = jnp.dtype(out_dtype).itemsize
    weight_bytes = (D_IN * H + H * H + H * N_HEAD) * 2 + (H + H + N_HEAD) * 4
    cost = pl.CostEstimate(
        flops=2 * B * (D_IN * H + H * H + H * N_HEAD),
        transcendentals=B * N_HEAD,  # tanh evaluated on all head lanes, then masked
        bytes_accessed=B * (D_IN * 4 + N_HEAD * out_bytes) + weight_bytes,
    )

    return pl.pallas_call(
        _kkt_kernel,
        grid_spec=pltpu.PrefetchScalarGridSpec(
            num_scalar_prefetch=0,
            grid=grid,
            in_specs=in_specs,
            out_specs=out_specs,
        ),
        out_shape=out_shape,
        cost_estimate=cost,
        compiler_params=pltpu.CompilerParams(
            dimension_semantics=("parallel",),
            # Headroom for large double-buffered batch tiles: above v5e's 16 MiB
            # default scoped limit, safely below v7x's 64 MiB physical VMEM.
            vmem_limit_bytes=48 * 1024 * 1024,
        ),
    )(x, packed["w1"], packed["b1"], packed["w2"], packed["b2"],
      packed["wh"], packed["bh"])


def _pick_batch_tile(B, max_tile=4096):
    """Largest power-of-two tile <= max_tile, multiple of 16 (bf16 sublane packing),
    dividing B, keeping grid >= 2 when possible (so the 'parallel' batch axis shards
    across v7x's two TensorCores)."""
    cap = min(max_tile, B // 2 if B >= 32 else B)
    tile = None
    t = 16
    while t <= cap:
        if B % t == 0:
            tile = t
        t *= 2
    if tile is None:
        tile = B  # fallback: single whole-batch tile (block == full array dim is legal)
    return tile


def split_head(head):
    """Consumer-side split of the fused head slab into (sol, ineq_mult, eq_mult)."""
    return (head[:, :N_SOL],
            head[:, N_SOL:N_SOL + N_INEQ],
            head[:, N_SOL + N_INEQ:])


def _init_params(key):
    """Deterministic synthetic parameter init (uniform, PyTorch-Linear-like scale)."""
    def lin(k, fan_in, fan_out):
        kw, kb = jax.random.split(k)
        bound = 1.0 / jnp.sqrt(fan_in)
        w = jax.random.uniform(kw, (fan_in, fan_out), jnp.float32, -bound, bound)
        b = jax.random.uniform(kb, (1, fan_out), jnp.float32, -bound, bound)
        return w, b

    keys = jax.random.split(key, 5)
    w1, b1 = lin(keys[0], D_IN, H)
    w2, b2 = lin(keys[1], H, H)
    ws, bs = lin(keys[2], H, N_SOL)
    wi, bi = lin(keys[3], H, N_INEQ)
    we, be = lin(keys[4], H, N_EQ)
    return dict(w1=w1, b1=b1, w2=w2, b2=b2,
                ws=ws, bs=bs, wi=wi, bi=bi, we=we, be=be)


def _reference_forward(x, p):
    """Pure-JAX f32 reference (matches the PyTorch module semantics)."""
    h = jnp.maximum(x @ p["w1"] + p["b1"], 0.0)
    shared = jnp.maximum(h @ p["w2"] + p["b2"], 0.0)
    sol = jnp.tanh(shared @ p["ws"] + p["bs"])
    ineq = jnp.maximum(shared @ p["wi"] + p["bi"], 0.0)
    eq = shared @ p["we"] + p["be"]
    return sol, ineq, eq


if __name__ == "__main__":
    key = jax.random.PRNGKey(0)
    kx, kp = jax.random.split(key)

    B = 256
    x = jax.random.normal(kx, (B, D_IN), jnp.float32)
    params = _init_params(kp)
    packed = pack_params(params)            # one-time cast/concat, out of the hot path

    batch_tile = _pick_batch_tile(B)        # -> 128 here, grid = 2 (both v7x TCs used)
    head = kkt_net_forward(x, packed, batch_tile=batch_tile)
    jax.block_until_ready(head)

    # Split only at the consumer (here: the correctness check), outside the jit.
    sol, ineq, eq = split_head(head.astype(jnp.float32))

    ref_sol, ref_ineq, ref_eq = _reference_forward(x, params)
    assert sol.shape == (B, N_SOL) and ineq.shape == (B, N_INEQ) and eq.shape == (B, N_EQ)
    # bf16 MXU operands (f32 accumulation) + bf16 output slab -> loosened tolerance
    # vs. the f32 reference.
    assert jnp.allclose(sol, ref_sol, atol=4e-2, rtol=4e-2)
    assert jnp.allclose(ineq, ref_ineq, atol=4e-2, rtol=4e-2)
    assert jnp.allclose(eq, ref_eq, atol=4e-2, rtol=4e-2)

    print("KERNEL_OK")
</pallas_src>

<mosaic_0001>
module attributes {stable_mosaic.version = 11 : i64} {
  func.func @_kkt_kernel(%arg0: i32, %arg1: memref<128x32xf32, #tpu.memory_space<vmem>>, %arg2: memref<32x64xbf16, #tpu.memory_space<vmem>>, %arg3: memref<1x64xf32, #tpu.memory_space<vmem>>, %arg4: memref<64x64xbf16, #tpu.memory_space<vmem>>, %arg5: memref<1x64xf32, #tpu.memory_space<vmem>>, %arg6: memref<64x28xbf16, #tpu.memory_space<vmem>>, %arg7: memref<1x28xf32, #tpu.memory_space<vmem>>, %arg8: memref<128x28xbf16, #tpu.memory_space<vmem>>) attributes {dimension_semantics = [#tpu.dimension_semantics<parallel>], iteration_bounds = array<i64: 2>, scalar_prefetch = 0 : i64, scratch_operands = 0 : i64, tpu.core_type = #tpu.core_type<tc>, window_params = [{transform_indices = @transform_0, window_bounds = array<i64: 128, 32>}, {pipeline_mode = #tpu.pipeline_mode<synchronous>, transform_indices = @transform_1, window_bounds = array<i64: 32, 64>}, {pipeline_mode = #tpu.pipeline_mode<synchronous>, transform_indices = @transform_2, window_bounds = array<i64: 1, 64>}, {pipeline_mode = #tpu.pipeline_mode<synchronous>, transform_indices = @transform_3, window_bounds = array<i64: 64, 64>}, {pipeline_mode = #tpu.pipeline_mode<synchronous>, transform_indices = @transform_4, window_bounds = array<i64: 1, 64>}, {pipeline_mode = #tpu.pipeline_mode<synchronous>, transform_indices = @transform_5, window_bounds = array<i64: 64, 28>}, {pipeline_mode = #tpu.pipeline_mode<synchronous>, transform_indices = @transform_6, window_bounds = array<i64: 1, 28>}, {transform_indices = @transform_7, window_bounds = array<i64: 128, 28>}]} {
    %c0 = arith.constant 0 : index
    %c0_0 = arith.constant 0 : index
    %0 = vector.load %arg1[%c0, %c0_0] : memref<128x32xf32, #tpu.memory_space<vmem>>, vector<128x32xf32>
    %1 = arith.truncf %0 : vector<128x32xf32> to vector<128x32xbf16>
    %c0_1 = arith.constant 0 : index
    %c0_2 = arith.constant 0 : index
    %2 = vector.load %arg2[%c0_1, %c0_2] : memref<32x64xbf16, #tpu.memory_space<vmem>>, vector<32x64xbf16>
    %cst = arith.constant dense<0.000000e+00> : vector<128x64xf32>
    %3 = tpu.matmul %1, %2, %cst {dimension_numbers = #tpu.dot_dimension_numbers<[1], [0], [0], [1], [0, 0, 1, 1], [], []>} : vector<128x32xbf16>, vector<32x64xbf16>, vector<128x64xf32> -> vector<128x64xf32>
    %c0_3 = arith.constant 0 : index
    %c0_4 = arith.constant 0 : index
    %4 = vector.load %arg3[%c0_3, %c0_4] : memref<1x64xf32, #tpu.memory_space<vmem>>, vector<1x64xf32>
    %5 = vector.broadcast %4 : vector<1x64xf32> to vector<128x64xf32>
    %6 = arith.addf %3, %5 : vector<128x64xf32>
    %cst_5 = arith.constant 0.000000e+00 : f32
    %7 = vector.broadcast %cst_5 : f32 to vector<128x64xf32>
    %8 = arith.maximumf %6, %7 : vector<128x64xf32>
    %9 = arith.truncf %8 : vector<128x64xf32> to vector<128x64xbf16>
    %c0_6 = arith.constant 0 : index
    %c0_7 = arith.constant 0 : index
    %10 = vector.load %arg4[%c0_6, %c0_7] : memref<64x64xbf16, #tpu.memory_space<vmem>>, vector<64x64xbf16>
    %cst_8 = arith.constant dense<0.000000e+00> : vector<128x64xf32>
    %11 = tpu.matmul %9, %10, %cst_8 {dimension_numbers = #tpu.dot_dimension_numbers<[1], [0], [0], [1], [0, 0, 1, 1], [], []>} : vector<128x64xbf16>, vector<64x64xbf16>, vector<128x64xf32> -> vector<128x64xf32>
    %c0_9 = arith.constant 0 : index
    %c0_10 = arith.constant 0 : index
    %12 = vector.load %arg5[%c0_9, %c0_10] : memref<1x64xf32, #tpu.memory_space<vmem>>, vector<1x64xf32>
    %13 = vector.broadcast %12 : vector<1x64xf32> to vector<128x64xf32>
    %14 = arith.addf %11, %13 : vector<128x64xf32>
    %cst_11 = arith.constant 0.000000e+00 : f32
    %15 = vector.broadcast %cst_11 : f32 to vector<128x64xf32>
    %16 = arith.maximumf %14, %15 : vector<128x64xf32>
    %17 = arith.truncf %16 : vector<128x64xf32> to vector<128x64xbf16>
    %c0_12 = arith.constant 0 : index
    %c0_13 = arith.constant 0 : index
    %18 = vector.load %arg6[%c0_12, %c0_13] : memref<64x28xbf16, #tpu.memory_space<vmem>>, vector<64x28xbf16>
    %cst_14 = arith.constant dense<0.000000e+00> : vector<128x28xf32>
    %19 = tpu.matmul %17, %18, %cst_14 {dimension_numbers = #tpu.dot_dimension_numbers<[1], [0], [0], [1], [0, 0, 1, 1], [], []>} : vector<128x64xbf16>, vector<64x28xbf16>, vector<128x28xf32> -> vector<128x28xf32>
    %c0_15 = arith.constant 0 : index
    %c0_16 = arith.constant 0 : index
    %20 = vector.load %arg7[%c0_15, %c0_16] : memref<1x28xf32, #tpu.memory_space<vmem>>, vector<1x28xf32>
    %21 = vector.broadcast %20 : vector<1x28xf32> to vector<128x28xf32>
    %22 = arith.addf %19, %21 : vector<128x28xf32>
    %23 = tpu.iota {dimensions = array<i32: 1>} : vector<128x28xi32>
    %c16_i32 = arith.constant 16 : i32
    %24 = vector.broadcast %c16_i32 : i32 to vector<128x28xi32>
    %25 = arith.cmpi slt, %23, %24 : vector<128x28xi32>
    %26 = math.tanh %22 : vector<128x28xf32>
    %c24_i32 = arith.constant 24 : i32
    %27 = vector.broadcast %c24_i32 : i32 to vector<128x28xi32>
    %28 = arith.cmpi slt, %23, %27 : vector<128x28xi32>
    %cst_17 = arith.constant 0.000000e+00 : f32
    %29 = vector.broadcast %cst_17 : f32 to vector<128x28xf32>
    %30 = arith.maximumf %22, %29 : vector<128x28xf32>
    %31 = arith.select %28, %30, %22 : vector<128x28xi1>, vector<128x28xf32>
    %32 = arith.select %25, %26, %31 : vector<128x28xi1>, vector<128x28xf32>
    %33 = arith.truncf %32 : vector<128x28xf32> to vector<128x28xbf16>
    %c0_18 = arith.constant 0 : index
    %c0_19 = arith.constant 0 : index
    %34 = vector.load %arg8[%c0_18, %c0_19] : memref<128x28xbf16, #tpu.memory_space<vmem>>, vector<128x28xbf16>
    tpu.vector_store %arg8[%c0_18, %c0_19], %33 {strides = array<i32>} : memref<128x28xbf16, #tpu.memory_space<vmem>>, vector<128x28xbf16>,
    return
  }
  func.func @transform_0(%arg0: i32) -> (i32, i32) {
    %c0_i32 = arith.constant 0 : i32
    %c0_i32_0 = arith.constant 0 : i32
    return %arg0, %c0_i32 : i32, i32
  }
  func.func @transform_1(%arg0: i32) -> (i32, i32) {
    %c0_i32 = arith.constant 0 : i32
    %c0_i32_0 = arith.constant 0 : i32
    %c0_i32_1 = arith.constant 0 : i32
    return %c0_i32, %c0_i32_0 : i32, i32
  }
  func.func @transform_2(%arg0: i32) -> (i32, i32) {
    %c0_i32 = arith.constant 0 : i32
    %c0_i32_0 = arith.constant 0 : i32
    %c0_i32_1 = arith.constant 0 : i32
    return %c0_i32, %c0_i32_0 : i32, i32
  }
  func.func @transform_3(%arg0: i32) -> (i32, i32) {
    %c0_i32 = arith.constant 0 : i32
    %c0_i32_0 = arith.constant 0 : i32
    %c0_i32_1 = arith.constant 0 : i32
    return %c0_i32, %c0_i32_0 : i32, i32
  }
  func.func @transform_4(%arg0: i32) -> (i32, i32) {
    %c0_i32 = arith.constant 0 : i32
    %c0_i32_0 = arith.constant 0 : i32
    %c0_i32_1 = arith.constant 0 : i32
    return %c0_i32, %c0_i32_0 : i32, i32
  }
  func.func @transform_5(%arg0: i32) -> (i32, i32) {
    %c0_i32 = arith.constant 0 : i32
    %c0_i32_0 = arith.constant 0 : i32
    %c0_i32_1 = arith.constant 0 : i32
    return %c0_i32, %c0_i32_0 : i32, i32
  }
  func.func @transform_6(%arg0: i32) -> (i32, i32) {
    %c0_i32 = arith.constant 0 : i32
    %c0_i32_0 = arith.constant 0 : i32
    %c0_i32_1 = arith.constant 0 : i32
    return %c0_i32, %c0_i32_0 : i32, i32
  }
  func.func @transform_7(%arg0: i32) -> (i32, i32) {
    %c0_i32 = arith.constant 0 : i32
    %c0_i32_0 = arith.constant 0 : i32
    return %arg0, %c0_i32 : i32, i32
  }
}

</mosaic_0001>

<llo_original>
// kernel: kkt_net_forward.1
$region0: #{kkt_net_forward.1}
  #allocation0 [shape = 'u32[]', space=smem, size = 0x4, offset = 0x4, fixed_abs, tag = 'smem constant byte address 0x4 - core index']
  #allocation1 [shape = 'u32[144,128]{1,0:T(1,128)}', space=vmem, size = 0x12000, scoped, tag = 'internal scratch']
  %s0 = inlined_call_operand.vmem [shape: f32[256,32], index: 0, kind: input, shape index: {}]
  %s1 = inlined_call_operand.vmem [shape: bf16[32,64], index: 1, kind: input, shape index: {}]
  %s2 = inlined_call_operand.vmem [shape: f32[1,64], index: 2, kind: input, shape index: {}]
  %s3 = inlined_call_operand.vmem [shape: bf16[64,64], index: 3, kind: input, shape index: {}]
  %s4 = inlined_call_operand.vmem [shape: f32[1,64], index: 4, kind: input, shape index: {}]
  %s5 = inlined_call_operand.vmem [shape: bf16[64,28], index: 5, kind: input, shape index: {}]
  %s6 = inlined_call_operand.vmem [shape: f32[1,28], index: 6, kind: input, shape index: {}]
  %s7 = inlined_call_operand.vmem [shape: bf16[256,28], index: 7, kind: output, shape index: {}]
  %s8 = sld [smem:[#allocation0]]
  $region61: #{kkt_net_forward.1} parent=0
    _
  %s10 = ssub.s32 1, %s8
  %s11 = scalar_select 0, %s10, %s8
  loop: start=0, step=1, limit=4
  $region2: #{kkt_net_forward.1} parent=0 // loop_pre_header
    _
  $region3: #{kkt_net_forward.1} parent=0 // loop_header
    %s13 = sphi 0, %s17
    %p14 = scmp.ge.s32.totalorder %s13, 4
    %s23 = sphi 0, %s25
    %s26 = sphi 0, %s23
    %s27 = sphi 0, %s26
    %s43 = sphi 0, %s27
    %s47 = sphi 0, %s47
    %s49 = sphi 0, %s47
    %s50 = sphi 0, %s49
    %s64 = sphi 0, %s50
    %s68 = sphi 0, %s68
    %s70 = sphi 0, %s68
    %s71 = sphi 0, %s70
    %s85 = sphi 0, %s71
    %s89 = sphi 0, %s89
    %s91 = sphi 0, %s89
    %s92 = sphi 0, %s91
    %s106 = sphi 0, %s92
    %s110 = sphi 0, %s110
    %s112 = sphi 0, %s110
    %s113 = sphi 0, %s112
    %s127 = sphi 0, %s113
    %s131 = sphi 0, %s131
    %s133 = sphi 0, %s131
    %s134 = sphi 0, %s133
    %s148 = sphi 0, %s134
    %s152 = sphi 0, %s152
    %s154 = sphi 0, %s152
    %s155 = sphi 0, %s154
    %s169 = sphi 0, %s155
    %s175 = sphi 0, %s177
    %s178 = sphi 0, %s175
    %s179 = sphi 0, %s178
    %s195 = sphi 0, %s179
  $region4: #{kkt_net_forward.1} parent=0 // loop_header_branch
    %16 = sbr.rel (%p14) target = $region8
  $region5: #{kkt_net_forward.1} parent=0 // loop_body
    %s18 = ssub.s32 %s13, 1
    %s19 = ssub.s32 %s13, 2
    %s20 = sadd.s32 %s13, 1
    %s21 = ssub.s32 %s13, %s20
    %p22 = scmp.eq.s32.totalorder %s21, 0
    %s24 = sadd.s32 %s23, 1
    %s25 = scalar_select %p22, %s23, %s24
    %p28 = pneg %p22
    %p29 = scmp.eq.s32.totalorder %s13, 1
    %p30 = por %p28, %p29
    %p31 = scmp.ne.s32.totalorder %s23, %s26
    %p32 = scmp.eq.s32.totalorder %s13, 0
    %p33 = por %p31, %p32
    %p34 = scmp.ne.s32.totalorder %s23, %s26
    %p35 = scmp.eq.s32.totalorder %s18, 1
    %p36 = por %p34, %p35
    %p37 = scmp.ne.s32.totalorder %s26, %s27
    %p38 = scmp.eq.s32.totalorder %s18, 0
    %p39 = por %p37, %p38
    %p40 = scmp.ne.s32.totalorder %s26, %s27
    %p41 = scmp.eq.s32.totalorder %s19, 1
    %p42 = por %p40, %p41
    %p44 = scmp.ne.s32.totalorder %s27, %s43
    %p45 = scmp.eq.s32.totalorder %s19, 0
    %p46 = por %p44, %p45
    %s48 = sadd.s32 %s47, 1
    %p51 = scmp.eq.s32.totalorder %s13, 1
    %p52 = scmp.ne.s32.totalorder %s47, %s49
    %p53 = scmp.eq.s32.totalorder %s13, 0
    %p54 = por %p52, %p53
    %p55 = scmp.ne.s32.totalorder %s47, %s49
    %p56 = scmp.eq.s32.totalorder %s18, 1
    %p57 = por %p55, %p56
    %p58 = scmp.ne.s32.totalorder %s49, %s50
    %p59 = scmp.eq.s32.totalorder %s18, 0
    %p60 = por %p58, %p59
    %p61 = scmp.ne.s32.totalorder %s49, %s50
    %p62 = scmp.eq.s32.totalorder %s19, 1
    %p63 = por %p61, %p62
    %p65 = scmp.ne.s32.totalorder %s50, %s64
    %p66 = scmp.eq.s32.totalorder %s19, 0
    %p67 = por %p65, %p66
    %s69 = sadd.s32 %s68, 1
    %p72 = scmp.eq.s32.totalorder %s13, 1
    %p73 = scmp.ne.s32.totalorder %s68, %s70
    %p74 = scmp.eq.s32.totalorder %s13, 0
    %p75 = por %p73, %p74
    %p76 = scmp.ne.s32.totalorder %s68, %s70
    %p77 = scmp.eq.s32.totalorder %s18, 1
    %p78 = por %p76, %p77
    %p79 = scmp.ne.s32.totalorder %s70, %s71
    %p80 = scmp.eq.s32.totalorder %s18, 0
    %p81 = por %p79, %p80
    %p82 = scmp.ne.s32.totalorder %s70, %s71
    %p83 = scmp.eq.s32.totalorder %s19, 1
    %p84 = por %p82, %p83
    %p86 = scmp.ne.s32.totalorder %s71, %s85
    %p87 = scmp.eq.s32.totalorder %s19, 0
    %p88 = por %p86, %p87
    %s90 = sadd.s32 %s89, 1
    %p93 = scmp.eq.s32.totalorder %s13, 1
    %p94 = scmp.ne.s32.totalorder %s89, %s91
    %p95 = scmp.eq.s32.totalorder %s13, 0
    %p96 = por %p94, %p95
    %p97 = scmp.ne.s32.totalorder %s89, %s91
    %p98 = scmp.eq.s32.totalorder %s18, 1
    %p99 = por %p97, %p98
    %p100 = scmp.ne.s32.totalorder %s91, %s92
    %p101 = scmp.eq.s32.totalorder %s18, 0
    %p102 = por %p100, %p101
    %p103 = scmp.ne.s32.totalorder %s91, %s92
    %p104 = scmp.eq.s32.totalorder %s19, 1
    %p105 = por %p103, %p104
    %p107 = scmp.ne.s32.totalorder %s92, %s106
    %p108 = scmp.eq.s32.totalorder %s19, 0
    %p109 = por %p107, %p108
    %s111 = sadd.s32 %s110, 1
    %p114 = scmp.eq.s32.totalorder %s13, 1
    %p115 = scmp.ne.s32.totalorder %s110, %s112
    %p116 = scmp.eq.s32.totalorder %s13, 0
    %p117 = por %p115, %p116
    %p118 = scmp.ne.s32.totalorder %s110, %s112
    %p119 = scmp.eq.s32.totalorder %s18, 1
    %p120 = por %p118, %p119
    %p121 = scmp.ne.s32.totalorder %s112, %s113
    %p122 = scmp.eq.s32.totalorder %s18, 0
    %p123 = por %p121, %p122
    %p124 = scmp.ne.s32.totalorder %s112, %s113
    %p125 = scmp.eq.s32.totalorder %s19, 1
    %p126 = por %p124, %p125
    %p128 = scmp.ne.s32.totalorder %s113, %s127
    %p129 = scmp.eq.s32.totalorder %s19, 0
    %p130 = por %p128, %p129
    %s132 = sadd.s32 %s131, 1
    %p135 = scmp.eq.s32.totalorder %s13, 1
    %p136 = scmp.ne.s32.totalorder %s131, %s133
    %p137 = scmp.eq.s32.totalorder %s13, 0
    %p138 = por %p136, %p137
    %p139 = scmp.ne.s32.totalorder %s131, %s133
    %p140 = scmp.eq.s32.totalorder %s18, 1
    %p141 = por %p139, %p140
    %p142 = scmp.ne.s32.totalorder %s133, %s134
    %p143 = scmp.eq.s32.totalorder %s18, 0
    %p144 = por %p142, %p143
    %p145 = scmp.ne.s32.totalorder %s133, %s134
    %p146 = scmp.eq.s32.totalorder %s19, 1
    %p147 = por %p145, %p146
    %p149 = scmp.ne.s32.totalorder %s134, %s148
    %p150 = scmp.eq.s32.totalorder %s19, 0
    %p151 = por %p149, %p150
    %s153 = sadd.s32 %s152, 1
    %p156 = scmp.eq.s32.totalorder %s13, 1
    %p157 = scmp.ne.s32.totalorder %s152, %s154
    %p158 = scmp.eq.s32.totalorder %s13, 0
    %p159 = por %p157, %p158
    %p160 = scmp.ne.s32.totalorder %s152, %s154
    %p161 = scmp.eq.s32.totalorder %s18, 1
    %p162 = por %p160, %p161
    %p163 = scmp.ne.s32.totalorder %s154, %s155
    %p164 = scmp.eq.s32.totalorder %s18, 0
    %p165 = por %p163, %p164
    %p166 = scmp.ne.s32.totalorder %s154, %s155
    %p167 = scmp.eq.s32.totalorder %s19, 1
    %p168 = por %p166, %p167
    %p170 = scmp.ne.s32.totalorder %s155, %s169
    %p171 = scmp.eq.s32.totalorder %s19, 0
    %p172 = por %p170, %p171
    %s173 = ssub.s32 %s13, %s20
    %p174 = scmp.eq.s32.totalorder %s173, 0
    %s176 = sadd.s32 %s175, 1
    %s177 = scalar_select %p174, %s175, %s176
    %p180 = pneg %p174
    %p181 = scmp.eq.s32.totalorder %s13, 1
    %p182 = por %p180, %p181
    %p183 = scmp.ne.s32.totalorder %s175, %s178
    %p184 = scmp.eq.s32.totalorder %s13, 0
    %p185 = por %p183, %p184
    %p186 = scmp.ne.s32.totalorder %s175, %s178
    %p187 = scmp.eq.s32.totalorder %s18, 1
    %p188 = por %p186, %p187
    %p189 = scmp.ne.s32.totalorder %s178, %s179
    %p190 = scmp.eq.s32.totalorder %s18, 0
    %p191 = por %p189, %p190
    %p192 = scmp.ne.s32.totalorder %s178, %s179
    %p193 = scmp.eq.s32.totalorder %s19, 1
    %p194 = por %p192, %p193
    %p196 = scmp.ne.s32.totalorder %s179, %s195
    %p197 = scmp.eq.s32.totalorder %s19, 0
    %p198 = por %p196, %p197
    %p199 = scmp.le.s32.totalorder 1, %s13
    %p200 = scmp.lt.s32.totalorder %s13, 3
    %p201 = pnand %p199, %p200
    %p202 = pneg %p201
    // Predicated region
    $region9: #{kkt_net_forward.1} parent=5 // pred_check
      _
    $region10: #{kkt_net_forward.1} parent=5 // pred_check_branch
      %204 = sbr.rel (%p201) target = $region12
    $region11: #{kkt_net_forward.1} parent=5 // pred_region
      %s205 = ssub.s32 %s13, 1
      // Predicated region
      $region13: #{kkt_net_forward.1} parent=11 // pred_check
        %p206 = pneg %p60
      $region14: #{kkt_net_forward.1} parent=11 // pred_check_branch
        %208 = sbr.rel (%p206) target = $region16
      $region15: #{kkt_net_forward.1} parent=11 // pred_region
        _
      $region16: #{kkt_net_forward.1} parent=11 // pred_fallthru
        _
      // Predicated region
      $region17: #{kkt_net_forward.1} parent=11 // pred_check
        %p209 = pneg %p81
      $region18: #{kkt_net_forward.1} parent=11 // pred_check_branch
        %211 = sbr.rel (%p209) target = $region20
      $region19: #{kkt_net_forward.1} parent=11 // pred_region
        _
      $region20: #{kkt_net_forward.1} parent=11 // pred_fallthru
        _
      // Predicated region
      $region21: #{kkt_net_forward.1} parent=11 // pred_check
        %p212 = pneg %p102
      $region22: #{kkt_net_forward.1} parent=11 // pred_check_branch
        %214 = sbr.rel (%p212) target = $region24
      $region23: #{kkt_net_forward.1} parent=11 // pred_region
        _
      $region24: #{kkt_net_forward.1} parent=11 // pred_fallthru
        _
      // Predicated region
      $region25: #{kkt_net_forward.1} parent=11 // pred_check
        %p215 = pneg %p123
      $region26: #{kkt_net_forward.1} parent=11 // pred_check_branch
        %217 = sbr.rel (%p215) target = $region28
      $region27: #{kkt_net_forward.1} parent=11 // pred_region
        _
      $region28: #{kkt_net_forward.1} parent=11 // pred_fallthru
        _
      // Predicated region
      $region29: #{kkt_net_forward.1} parent=11 // pred_check
        %p218 = pneg %p144
      $region30: #{kkt_net_forward.1} parent=11 // pred_check_branch
        %220 = sbr.rel (%p218) target = $region32
      $region31: #{kkt_net_forward.1} parent=11 // pred_region
        _
      $region32: #{kkt_net_forward.1} parent=11 // pred_fallthru
        _
      // Predicated region
      $region33: #{kkt_net_forward.1} parent=11 // pred_check
        %p221 = pneg %p165
      $region34: #{kkt_net_forward.1} parent=11 // pred_check_branch
        %223 = sbr.rel (%p221) target = $region36
      $region35: #{kkt_net_forward.1} parent=11 // pred_region
        _
      $region36: #{kkt_net_forward.1} parent=11 // pred_fallthru
        _
    $region12: #{kkt_net_forward.1} parent=5 // pred_fallthru
      _
    %p224 = scmp.lt.s32.totalorder %s13, 2
    // Predicated region
    $region37: #{kkt_net_forward.1} parent=5 // pred_check
      %p225 = pneg %p224
    $region38: #{kkt_net_forward.1} parent=5 // pred_check_branch
      %227 = sbr.rel (%p225) target = $region40
    $region39: #{kkt_net_forward.1} parent=5 // pred_region
      // Predicated region
      $region41: #{kkt_net_forward.1} parent=39 // pred_check
        %p228 = pneg %p33
      $region42: #{kkt_net_forward.1} parent=39 // pred_check_branch
        %230 = sbr.rel (%p228) target = $region44
      $region43: #{kkt_net_forward.1} parent=39 // pred_region
        %s231 = smul.u32 16, %s13
        %p232 = scmp.lt.s32.totalorder %s231, 31
        %s233 = scalar_select %p232, %s231, 31
        %s234 = smul.addr %s233, 8
        %s235 = scalar_lea.vmem %s0, %s234
        %s236 = smul.u32 16, %s13
      $region44: #{kkt_net_forward.1} parent=39 // pred_fallthru
        _
    $region40: #{kkt_net_forward.1} parent=5 // pred_fallthru
      _
    %p237 = scmp.le.s32.totalorder 1, %s13
    %p238 = scmp.lt.s32.totalorder %s13, 3
    %p239 = pnand %p237, %p238
    %p240 = pneg %p239
    // Predicated region
    $region45: #{kkt_net_forward.1} parent=5 // pred_check
      _
    $region46: #{kkt_net_forward.1} parent=5 // pred_check_branch
      %242 = sbr.rel (%p239) target = $region48
    $region47: #{kkt_net_forward.1} parent=5 // pred_region
      %s243 = ssub.s32 %s13, 1
      %s244 = smul.u32 16, %s18
      %p245 = scmp.lt.s32.totalorder %s244, 31
      %s246 = scalar_select %p245, %s244, 31
      %s247 = smul.addr %s246, 8
      %s248 = scalar_lea.vmem %s0, %s247
      %p249 = pneg %p39
      %p250 = pneg %p36
      %p251 = pneg %p60
      %p252 = pneg %p57
      %p253 = pneg %p81
      %p254 = pneg %p78
      %p255 = pneg %p102
      %p256 = pneg %p99
      %p257 = pneg %p123
      %p258 = pneg %p120
      %p259 = pneg %p144
      %p260 = pneg %p141
      %p261 = pneg %p165
      %p262 = pneg %p162
      %p263 = pneg %p191
      %p264 = pneg %p188
      %s265 = smul.u32 16, %s18
      %p266 = scmp.lt.s32.totalorder %s265, 31
      %s267 = scalar_select %p266, %s265, 31
      %s268 = smul.addr %s267, 4
      %s269 = scalar_lea.vmem %s7, %s268
      %s270 = smul.u32 16, %s18
      %p271 = scmp.lt.s32.totalorder %s270, 31
      %s272 = scalar_select %p271, %s270, 31
      %s273 = smul.addr %s272, 8
      %s274 = scalar_lea.vmem %s0, %s273
      %s275 = smul.u32 16, %s18
      %s276 = smul.u32 16, %s18
      %p277 = scmp.lt.s32.totalorder %s276, 31
      %s278 = scalar_select %p277, %s276, 31
      %s279 = smul.addr %s278, 4
      %s280 = scalar_lea.vmem %s7, %s279
      %s281 = smul.u32 16, %s18
      %v283 = vld [vmem:[%s274] sm:$0xff]
      %v284 = vld [vmem:[%s274 + $0x8] sm:$0xff]
      %v285 = vld [vmem:[%s274 + $0x10] sm:$0xff]
      %v286 = vld [vmem:[%s274 + $0x18] sm:$0xff]
      %v287 = vld [vmem:[%s274 + $0x20] sm:$0xff]
      %v288 = vld [vmem:[%s274 + $0x28] sm:$0xff]
      %v289 = vld [vmem:[%s274 + $0x30] sm:$0xff]
      %v290 = vld [vmem:[%s274 + $0x38] sm:$0xff]
      %v291 = vld [vmem:[%s274 + $0x40] sm:$0xff]
      %v292 = vld [vmem:[%s274 + $0x48] sm:$0xff]
      %v293 = vld [vmem:[%s274 + $0x50] sm:$0xff]
      %v294 = vld [vmem:[%s274 + $0x58] sm:$0xff]
      %v295 = vld [vmem:[%s274 + $0x60] sm:$0xff]
      %v296 = vld [vmem:[%s274 + $0x68] sm:$0xff]
      %v297 = vld [vmem:[%s274 + $0x70] sm:$0xff]
      %v298 = vld [vmem:[%s274 + $0x78] sm:$0xff]
      %v299 = vpack.c.bf16 %v284, %v283
      %v300 = vpack.c.bf16 %v286, %v285
      %v301 = vpack.c.bf16 %v288, %v287
      %v302 = vpack.c.bf16 %v290, %v289
      %v303 = vpack.c.bf16 %v292, %v291
      %v304 = vpack.c.bf16 %v294, %v293
      %v305 = vpack.c.bf16 %v296, %v295
      %v306 = vpack.c.bf16 %v298, %v297
      %v307 = vld [vmem:[%s1] sm:$0xf]
      %v308 = vld [vmem:[%s1 + $0x4] sm:$0xf]
      %v309 = vld [vmem:[%s1 + $0x8] sm:$0xf]
      %v310 = vld [vmem:[%s1 + $0xc] sm:$0xf]
      %v311 = vld [vmem:[%s2] sm:$0x1]
      %v313 = vlaneseq
      %v314 = vshrl.u32 %v313, 7
      %v315 = vsub.s32 0, %v314
      %v316 = vrot.slane %v311, %v315
      %v322 = vunpack.c.l.b16 %v307
      %v323 = vunpack.c.l.b16 %v308
      %v324 = vunpack.c.l.b16 %v309
      %v325 = vunpack.c.l.b16 %v310
      %v326 = vpack.c.b16 %v323, %v322
      %v327 = vpack.c.b16 %v325, %v324
      %vm330 = vcmask 261120
      %v332 = vsel %vm330, %v299, 0
      %v335 = vsel %vm330, %v300, 0
      %v338 = vsel %vm330, %v301, 0
      %v341 = vsel %vm330, %v302, 0
      %v344 = vsel %vm330, %v303, 0
      %v347 = vsel %vm330, %v304, 0
      %v350 = vsel %vm330, %v305, 0
      %v353 = vsel %vm330, %v306, 0
      %355 = vmatprep.subr.bf16.mxu0 0
      %356 = vmatpush1.bf16.msra.mxu0 0
      %357 = vmatprep.subr.bf16.mxu0 0
      %358 = vmatpush1.bf16.msra.mxu0 0
      %359 = vmatprep.subr.bf16.mxu0 0
      %360 = vmatpush1.bf16.msra.mxu0 0
      %361 = vmatprep.subr.bf16.mxu0 0
      %362 = vmatpush1.bf16.msra.mxu0 0
      %363 = vmatprep.subr.bf16.mxu0 0
      %364 = vmatpush1.bf16.msra.mxu0 0
      %365 = vmatprep.subr.bf16.mxu0 0
      %366 = vmatpush1.bf16.msra.mxu0 0
      %367 = vmatprep.subr.bf16.mxu0 0
      %368 = vmatpush1.bf16.msra.mxu0 %v327
      %369 = vmatprep.subr.bf16.mxu0 0
      %370 = vmatpush1.bf16.msra.mxu0 %v326
      %371 = vmatprep.subr.bf16.mxu0 0
      %372 = vmatpush2.bf16.msra.mxu0 0
      %373 = vmatprep.subr.bf16.mxu0 0
      %374 = vmatpush2.bf16.msra.mxu0 0
      %375 = vmatprep.subr.bf16.mxu0 0
      %376 = vmatpush2.bf16.msra.mxu0 0
      %377 = vmatprep.subr.bf16.mxu0 0
      %378 = vmatpush2.bf16.msra.mxu0 0
      %379 = vmatprep.subr.bf16.mxu0 0
      %380 = vmatpush2.bf16.msra.mxu0 0
      %381 = vmatprep.subr.bf16.mxu0 0
      %382 = vmatpush2.bf16.msra.mxu0 0
      %383 = vmatprep.subr.bf16.mxu0 0
      %384 = vmatpush2.bf16.msra.mxu0 0
      %385 = vmatprep.subr.bf16.mxu0 0
      %386 = vmatpush2.bf16.msra.mxu0 0
      %387 = vmatprep.mubr.bf16.mxu0 0
      %388 = vmatmul.mubr.bf16.gmra.mxu0 %v332
      %v389 = vpop.f32.mrf.mxu0
      %v390 = vadd.f32 %v316, %v389
      %v391 = vpop.f32.mrf.mxu0
      %v392 = vpop.f32.mrf.mxu0
      %v393 = vadd.f32 %v316, %v392
      %v394 = vpop.f32.mrf.mxu0
      %395 = vmatprep.mubr.bf16.mxu0 0
      %396 = vmatmul.mubr.bf16.gmra.mxu0 %v335
      %v397 = vpop.f32.mrf.mxu0
      %v398 = vadd.f32 %v316, %v397
      %v399 = vpop.f32.mrf.mxu0
      %v400 = vpop.f32.mrf.mxu0
      %v401 = vadd.f32 %v316, %v400
      %v402 = vpop.f32.mrf.mxu0
      %403 = vmatprep.mubr.bf16.mxu0 0
      %404 = vmatmul.mubr.bf16.gmra.mxu0 %v338
      %v405 = vpop.f32.mrf.mxu0
      %v406 = vadd.f32 %v316, %v405
      %v407 = vpop.f32.mrf.mxu0
      %v408 = vpop.f32.mrf.mxu0
      %v409 = vadd.f32 %v316, %v408
      %v410 = vpop.f32.mrf.mxu0
      %411 = vmatprep.mubr.bf16.mxu0 0
      %412 = vmatmul.mubr.bf16.gmra.mxu0 %v341
      %v413 = vpop.f32.mrf.mxu0
      %v414 = vadd.f32 %v316, %v413
      %v415 = vpop.f32.mrf.mxu0
      %v416 = vpop.f32.mrf.mxu0
      %v417 = vadd.f32 %v316, %v416
      %v418 = vpop.f32.mrf.mxu0
      %419 = vmatprep.mubr.bf16.mxu0 0
      %420 = vmatmul.mubr.bf16.gmra.mxu0 %v344
      %v421 = vpop.f32.mrf.mxu0
      %v422 = vadd.f32 %v316, %v421
      %v423 = vpop.f32.mrf.mxu0
      %v424 = vpop.f32.mrf.mxu0
      %v425 = vadd.f32 %v316, %v424
      %v426 = vpop.f32.mrf.mxu0
      %427 = vmatprep.mubr.bf16.mxu0 0
      %428 = vmatmul.mubr.bf16.gmra.mxu0 %v347
      %v429 = vpop.f32.mrf.mxu0
      %v430 = vadd.f32 %v316, %v429
      %v431 = vpop.f32.mrf.mxu0
      %v432 = vpop.f32.mrf.mxu0
      %v433 = vadd.f32 %v316, %v432
      %v434 = vpop.f32.mrf.mxu0
      %435 = vmatprep.mubr.bf16.mxu0 0
      %436 = vmatmul.mubr.bf16.gmra.mxu0 %v350
      %v437 = vpop.f32.mrf.mxu0
      %v438 = vadd.f32 %v316, %v437
      %v439 = vpop.f32.mrf.mxu0
      %v440 = vpop.f32.mrf.mxu0
      %v441 = vadd.f32 %v316, %v440
      %v442 = vpop.f32.mrf.mxu0
      %443 = vmatprep.mubr.bf16.mxu0 0
      %444 = vmatmul.mubr.bf16.gmra.mxu0 %v353
      %v445 = vpop.f32.mrf.mxu0
      %v446 = vadd.f32 %v316, %v445
      %v447 = vpop.f32.mrf.mxu0
      %v448 = vpop.f32.mrf.mxu0
      %v449 = vadd.f32 %v316, %v448
      %v450 = vpop.f32.mrf.mxu0
      %451 = vdwg.mxu0
      %v452 = vmax.f32 %v390, 0.0
      %v453 = vmax.f32 %v393, 0.0
      %v454 = vmax.f32 %v398, 0.0
      %v455 = vmax.f32 %v401, 0.0
      %v456 = vmax.f32 %v406, 0.0
      %v457 = vmax.f32 %v409, 0.0
      %v458 = vmax.f32 %v414, 0.0
      %v459 = vmax.f32 %v417, 0.0
      %v460 = vmax.f32 %v422, 0.0
      %v461 = vmax.f32 %v425, 0.0
      %v462 = vmax.f32 %v430, 0.0
      %v463 = vmax.f32 %v433, 0.0
      %v464 = vmax.f32 %v438, 0.0
      %v465 = vmax.f32 %v441, 0.0
      %v466 = vmax.f32 %v446, 0.0
      %v467 = vmax.f32 %v449, 0.0
      %v468 = vpack.c.bf16 %v453, %v452
      %v469 = vpack.c.bf16 %v455, %v454
      %v470 = vpack.c.bf16 %v457, %v456
      %v471 = vpack.c.bf16 %v459, %v458
      %v472 = vpack.c.bf16 %v461, %v460
      %v473 = vpack.c.bf16 %v463, %v462
      %v474 = vpack.c.bf16 %v465, %v464
      %v475 = vpack.c.bf16 %v467, %v466
      %v476 = vld [vmem:[%s3] sm:$0xf]
      %v477 = vld [vmem:[%s3 + $0x4] sm:$0xf]
      %v478 = vld [vmem:[%s3 + $0x8] sm:$0xf]
      %v479 = vld [vmem:[%s3 + $0xc] sm:$0xf]
      %v480 = vld [vmem:[%s3 + $0x10] sm:$0xf]
      %v481 = vld [vmem:[%s3 + $0x14] sm:$0xf]
      %v482 = vld [vmem:[%s3 + $0x18] sm:$0xf]
      %v483 = vld [vmem:[%s3 + $0x1c] sm:$0xf]
      %v484 = vld [vmem:[%s4] sm:$0x1]
      %v486 = vlaneseq
      %v487 = vshrl.u32 %v486, 7
      %v488 = vsub.s32 0, %v487
      %v489 = vrot.slane %v484, %v488
      %v499 = vunpack.c.l.b16 %v476
      %v500 = vunpack.c.l.b16 %v477
      %v501 = vunpack.c.l.b16 %v478
      %v502 = vunpack.c.l.b16 %v479
      %v503 = vunpack.c.l.b16 %v480
      %v504 = vunpack.c.l.b16 %v481
      %v505 = vunpack.c.l.b16 %v482
      %v506 = vunpack.c.l.b16 %v483
      %v507 = vpack.c.b16 %v500, %v499
      %v508 = vpack.c.b16 %v502, %v501
      %v509 = vpack.c.b16 %v504, %v503
      %v510 = vpack.c.b16 %v506, %v505
      %vm515 = vcmask 523264
      %v517 = vsel %vm515, %v468, 0
      %v520 = vsel %vm515, %v469, 0
      %v523 = vsel %vm515, %v470, 0
      %v526 = vsel %vm515, %v471, 0
      %v529 = vsel %vm515, %v472, 0
      %v532 = vsel %vm515, %v473, 0
      %v535 = vsel %vm515, %v474, 0
      %v538 = vsel %vm515, %v475, 0
      %540 = vmatprep.subr.bf16.mxu0 0
      %541 = vmatpush1.bf16.msra.mxu0 0
      %542 = vmatprep.subr.bf16.mxu0 0
      %543 = vmatpush1.bf16.msra.mxu0 0
      %544 = vmatprep.subr.bf16.mxu0 0
      %545 = vmatpush1.bf16.msra.mxu0 0
      %546 = vmatprep.subr.bf16.mxu0 0
      %547 = vmatpush1.bf16.msra.mxu0 0
      %548 = vmatprep.subr.bf16.mxu0 0
      %549 = vmatpush1.bf16.msra.mxu0 %v510
      %550 = vmatprep.subr.bf16.mxu0 0
      %551 = vmatpush1.bf16.msra.mxu0 %v509
      %552 = vmatprep.subr.bf16.mxu0 0
      %553 = vmatpush1.bf16.msra.mxu0 %v508
      %554 = vmatprep.subr.bf16.mxu0 0
      %555 = vmatpush1.bf16.msra.mxu0 %v507
      %556 = vmatprep.subr.bf16.mxu0 0
      %557 = vmatpush2.bf16.msra.mxu0 0
      %558 = vmatprep.subr.bf16.mxu0 0
      %559 = vmatpush2.bf16.msra.mxu0 0
      %560 = vmatprep.subr.bf16.mxu0 0
      %561 = vmatpush2.bf16.msra.mxu0 0
      %562 = vmatprep.subr.bf16.mxu0 0
      %563 = vmatpush2.bf16.msra.mxu0 0
      %564 = vmatprep.subr.bf16.mxu0 0
      %565 = vmatpush2.bf16.msra.mxu0 0
      %566 = vmatprep.subr.bf16.mxu0 0
      %567 = vmatpush2.bf16.msra.mxu0 0
      %568 = vmatprep.subr.bf16.mxu0 0
      %569 = vmatpush2.bf16.msra.mxu0 0
      %570 = vmatprep.subr.bf16.mxu0 0
      %571 = vmatpush2.bf16.msra.mxu0 0
      %572 = vmatprep.mubr.bf16.mxu0 0
      %573 = vmatmul.mubr.bf16.gmra.mxu0 %v517
      %v574 = vpop.f32.mrf.mxu0
      %v575 = vadd.f32 %v489, %v574
      %v576 = vpop.f32.mrf.mxu0
      %v577 = vpop.f32.mrf.mxu0
      %v578 = vadd.f32 %v489, %v577
      %v579 = vpop.f32.mrf.mxu0
      %580 = vmatprep.mubr.bf16.mxu0 0
      %581 = vmatmul.mubr.bf16.gmra.mxu0 %v520
      %v582 = vpop.f32.mrf.mxu0
      %v583 = vadd.f32 %v489, %v582
      %v584 = vpop.f32.mrf.mxu0
      %v585 = vpop.f32.mrf.mxu0
      %v586 = vadd.f32 %v489, %v585
      %v587 = vpop.f32.mrf.mxu0
      %588 = vmatprep.mubr.bf16.mxu0 0
      %589 = vmatmul.mubr.bf16.gmra.mxu0 %v523
      %v590 = vpop.f32.mrf.mxu0
      %v591 = vadd.f32 %v489, %v590
      %v592 = vpop.f32.mrf.mxu0
      %v593 = vpop.f32.mrf.mxu0
      %v594 = vadd.f32 %v489, %v593
      %v595 = vpop.f32.mrf.mxu0
      %596 = vmatprep.mubr.bf16.mxu0 0
      %597 = vmatmul.mubr.bf16.gmra.mxu0 %v526
      %v598 = vpop.f32.mrf.mxu0
      %v599 = vadd.f32 %v489, %v598
      %v600 = vpop.f32.mrf.mxu0
      %v601 = vpop.f32.mrf.mxu0
      %v602 = vadd.f32 %v489, %v601
      %v603 = vpop.f32.mrf.mxu0
      %604 = vmatprep.mubr.bf16.mxu0 0
      %605 = vmatmul.mubr.bf16.gmra.mxu0 %v529
      %v606 = vpop.f32.mrf.mxu0
      %v607 = vadd.f32 %v489, %v606
      %v608 = vpop.f32.mrf.mxu0
      %v609 = vpop.f32.mrf.mxu0
      %v610 = vadd.f32 %v489, %v609
      %v611 = vpop.f32.mrf.mxu0
      %612 = vmatprep.mubr.bf16.mxu0 0
      %613 = vmatmul.mubr.bf16.gmra.mxu0 %v532
      %v614 = vpop.f32.mrf.mxu0
      %v615 = vadd.f32 %v489, %v614
      %v616 = vpop.f32.mrf.mxu0
      %v617 = vpop.f32.mrf.mxu0
      %v618 = vadd.f32 %v489, %v617
      %v619 = vpop.f32.mrf.mxu0
      %620 = vmatprep.mubr.bf16.mxu0 0
      %621 = vmatmul.mubr.bf16.gmra.mxu0 %v535
      %v622 = vpop.f32.mrf.mxu0
      %v623 = vadd.f32 %v489, %v622
      %v624 = vpop.f32.mrf.mxu0
      %v625 = vpop.f32.mrf.mxu0
      %v626 = vadd.f32 %v489, %v625
      %v627 = vpop.f32.mrf.mxu0
      %628 = vmatprep.mubr.bf16.mxu0 0
      %629 = vmatmul.mubr.bf16.gmra.mxu0 %v538
      %v630 = vpop.f32.mrf.mxu0
      %v631 = vadd.f32 %v489, %v630
      %v632 = vpop.f32.mrf.mxu0
      %v633 = vpop.f32.mrf.mxu0
      %v634 = vadd.f32 %v489, %v633
      %v635 = vpop.f32.mrf.mxu0
      %636 = vdwg.mxu0
      %v637 = vmax.f32 %v575, 0.0
      %v638 = vmax.f32 %v578, 0.0
      %v639 = vmax.f32 %v583, 0.0
      %v640 = vmax.f32 %v586, 0.0
      %v641 = vmax.f32 %v591, 0.0
      %v642 = vmax.f32 %v594, 0.0
      %v643 = vmax.f32 %v599, 0.0
      %v644 = vmax.f32 %v602, 0.0
      %v645 = vmax.f32 %v607, 0.0
      %v646 = vmax.f32 %v610, 0.0
      %v647 = vmax.f32 %v615, 0.0
      %v648 = vmax.f32 %v618, 0.0
      %v649 = vmax.f32 %v623, 0.0
      %v650 = vmax.f32 %v626, 0.0
      %v651 = vmax.f32 %v631, 0.0
      %v652 = vmax.f32 %v634, 0.0
      %v653 = vpack.c.bf16 %v638, %v637
      %v654 = vpack.c.bf16 %v640, %v639
      %v655 = vpack.c.bf16 %v642, %v641
      %v656 = vpack.c.bf16 %v644, %v643
      %v657 = vpack.c.bf16 %v646, %v645
      %v658 = vpack.c.bf16 %v648, %v647
      %v659 = vpack.c.bf16 %v650, %v649
      %v660 = vpack.c.bf16 %v652, %v651
      %v661 = vld [vmem:[%s5] sm:$0xf]
      %v662 = vld [vmem:[%s5 + $0x4] sm:$0xf]
      %v663 = vld [vmem:[%s5 + $0x8] sm:$0xf]
      %v664 = vld [vmem:[%s5 + $0xc] sm:$0xf]
      %v665 = vld [vmem:[%s5 + $0x10] sm:$0xf]
      %v666 = vld [vmem:[%s5 + $0x14] sm:$0xf]
      %v667 = vld [vmem:[%s5 + $0x18] sm:$0xf]
      %v668 = vld [vmem:[%s5 + $0x1c] sm:$0xf]
      %v669 = vld [vmem:[%s6] sm:$0x1]
      %v671 = vlaneseq
      %v672 = vshrl.u32 %v671, 7
      %v673 = vsub.s32 0, %v672
      %v674 = vrot.slane %v669, %v673
      %v684 = vunpack.c.l.b16 %v661
      %v685 = vunpack.c.l.b16 %v662
      %v686 = vunpack.c.l.b16 %v663
      %v687 = vunpack.c.l.b16 %v664
      %v688 = vunpack.c.l.b16 %v665
      %v689 = vunpack.c.l.b16 %v666
      %v690 = vunpack.c.l.b16 %v667
      %v691 = vunpack.c.l.b16 %v668
      %v692 = vpack.c.b16 %v685, %v684
      %v693 = vpack.c.b16 %v687, %v686
      %v694 = vpack.c.b16 %v689, %v688
      %v695 = vpack.c.b16 %v691, %v690
      %v701 = vsel %vm515, %v653, 0
      %v704 = vsel %vm515, %v654, 0
      %v707 = vsel %vm515, %v655, 0
      %v710 = vsel %vm515, %v656, 0
      %v713 = vsel %vm515, %v657, 0
      %v716 = vsel %vm515, %v658, 0
      %v719 = vsel %vm515, %v659, 0
      %v722 = vsel %vm515, %v660, 0
      %724 = vmatprep.subr.bf16.mxu0 0
      %725 = vmatpush1.bf16.msra.mxu0 0
      %726 = vmatprep.subr.bf16.mxu0 0
      %727 = vmatpush1.bf16.msra.mxu0 0
      %728 = vmatprep.subr.bf16.mxu0 0
      %729 = vmatpush1.bf16.msra.mxu0 0
      %730 = vmatprep.subr.bf16.mxu0 0
      %731 = vmatpush1.bf16.msra.mxu0 0
      %732 = vmatprep.subr.bf16.mxu0 0
      %733 = vmatpush1.bf16.msra.mxu0 %v695
      %734 = vmatprep.subr.bf16.mxu0 0
      %735 = vmatpush1.bf16.msra.mxu0 %v694
      %736 = vmatprep.subr.bf16.mxu0 0
      %737 = vmatpush1.bf16.msra.mxu0 %v693
      %738 = vmatprep.subr.bf16.mxu0 0
      %739 = vmatpush1.bf16.msra.mxu0 %v692
      %740 = vmatprep.subr.bf16.mxu0 0
      %741 = vmatpush2.bf16.msra.mxu0 0
      %742 = vmatprep.subr.bf16.mxu0 0
      %743 = vmatpush2.bf16.msra.mxu0 0
      %744 = vmatprep.subr.bf16.mxu0 0
      %745 = vmatpush2.bf16.msra.mxu0 0
      %746 = vmatprep.subr.bf16.mxu0 0
      %747 = vmatpush2.bf16.msra.mxu0 0
      %748 = vmatprep.subr.bf16.mxu0 0
      %749 = vmatpush2.bf16.msra.mxu0 0
      %750 = vmatprep.subr.bf16.mxu0 0
      %751 = vmatpush2.bf16.msra.mxu0 0
      %752 = vmatprep.subr.bf16.mxu0 0
      %753 = vmatpush2.bf16.msra.mxu0 0
      %754 = vmatprep.subr.bf16.mxu0 0
      %755 = vmatpush2.bf16.msra.mxu0 0
      %756 = vmatprep.mubr.bf16.mxu0 0
      %757 = vmatmul.mubr.bf16.gmra.mxu0 %v701
      %v758 = vpop.f32.mrf.mxu0
      %v759 = vadd.f32 %v674, %v758
      %v760 = vpop.f32.mrf.mxu0
      %v761 = vpop.f32.mrf.mxu0
      %v762 = vadd.f32 %v674, %v761
      %v763 = vpop.f32.mrf.mxu0
      %764 = vmatprep.mubr.bf16.mxu0 0
      %765 = vmatmul.mubr.bf16.gmra.mxu0 %v704
      %v766 = vpop.f32.mrf.mxu0
      %v767 = vadd.f32 %v674, %v766
      %v768 = vpop.f32.mrf.mxu0
      %v769 = vpop.f32.mrf.mxu0
      %v770 = vadd.f32 %v674, %v769
      %v771 = vpop.f32.mrf.mxu0
      %772 = vmatprep.mubr.bf16.mxu0 0
      %773 = vmatmul.mubr.bf16.gmra.mxu0 %v707
      %v774 = vpop.f32.mrf.mxu0
      %v775 = vadd.f32 %v674, %v774
      %v776 = vpop.f32.mrf.mxu0
      %v777 = vpop.f32.mrf.mxu0
      %v778 = vadd.f32 %v674, %v777
      %v779 = vpop.f32.mrf.mxu0
      %780 = vmatprep.mubr.bf16.mxu0 0
      %781 = vmatmul.mubr.bf16.gmra.mxu0 %v710
      %v782 = vpop.f32.mrf.mxu0
      %v783 = vadd.f32 %v674, %v782
      %v784 = vpop.f32.mrf.mxu0
      %v785 = vpop.f32.mrf.mxu0
      %v786 = vadd.f32 %v674, %v785
      %v787 = vpop.f32.mrf.mxu0
      %788 = vmatprep.mubr.bf16.mxu0 0
      %789 = vmatmul.mubr.bf16.gmra.mxu0 %v713
      %v790 = vpop.f32.mrf.mxu0
      %v791 = vadd.f32 %v674, %v790
      %v792 = vpop.f32.mrf.mxu0
      %v793 = vpop.f32.mrf.mxu0
      %v794 = vadd.f32 %v674, %v793
      %v795 = vpop.f32.mrf.mxu0
      %796 = vmatprep.mubr.bf16.mxu0 0
      %797 = vmatmul.mubr.bf16.gmra.mxu0 %v716
      %v798 = vpop.f32.mrf.mxu0
      %v799 = vadd.f32 %v674, %v798
      %v800 = vpop.f32.mrf.mxu0
      %v801 = vpop.f32.mrf.mxu0
      %v802 = vadd.f32 %v674, %v801
      %v803 = vpop.f32.mrf.mxu0
      %804 = vmatprep.mubr.bf16.mxu0 0
      %805 = vmatmul.mubr.bf16.gmra.mxu0 %v719
      %v806 = vpop.f32.mrf.mxu0
      %v807 = vadd.f32 %v674, %v806
      %v808 = vpop.f32.mrf.mxu0
      %v809 = vpop.f32.mrf.mxu0
      %v810 = vadd.f32 %v674, %v809
      %v811 = vpop.f32.mrf.mxu0
      %812 = vmatprep.mubr.bf16.mxu0 0
      %813 = vmatmul.mubr.bf16.gmra.mxu0 %v722
      %v814 = vpop.f32.mrf.mxu0
      %v815 = vadd.f32 %v674, %v814
      %v816 = vpop.f32.mrf.mxu0
      %v817 = vpop.f32.mrf.mxu0
      %v818 = vadd.f32 %v674, %v817
      %v819 = vpop.f32.mrf.mxu0
      %820 = vdwg.mxu0
      %v821 = vlaneseq
      %v822 = vand.u32 %v821, 127
      %vm823 = vcmp.lt.s32.totalorder %v822, 16
      %v824 = vtanh.pop %v759
      %v825 = vtanh.pop %v762
      %v826 = vtanh.pop %v767
      %v827 = vtanh.pop %v770
      %v828 = vtanh.pop %v775
      %v829 = vtanh.pop %v778
      %v830 = vtanh.pop %v783
      %v831 = vtanh.pop %v786
      %v832 = vtanh.pop %v791
      %v833 = vtanh.pop %v794
      %v834 = vtanh.pop %v799
      %v835 = vtanh.pop %v802
      %v836 = vtanh.pop %v807
      %v837 = vtanh.pop %v810
      %v838 = vtanh.pop %v815
      %v839 = vtanh.pop %v818
      %vm840 = vcmp.lt.s32.totalorder %v822, 24
      %v841 = vmax.f32 %v759, 0.0
      %v842 = vmax.f32 %v762, 0.0
      %v843 = vmax.f32 %v767, 0.0
      %v844 = vmax.f32 %v770, 0.0
      %v845 = vmax.f32 %v775, 0.0
      %v846 = vmax.f32 %v778, 0.0
      %v847 = vmax.f32 %v783, 0.0
      %v848 = vmax.f32 %v786, 0.0
      %v849 = vmax.f32 %v791, 0.0
      %v850 = vmax.f32 %v794, 0.0
      %v851 = vmax.f32 %v799, 0.0
      %v852 = vmax.f32 %v802, 0.0
      %v853 = vmax.f32 %v807, 0.0
      %v854 = vmax.f32 %v810, 0.0
      %v855 = vmax.f32 %v815, 0.0
      %v856 = vmax.f32 %v818, 0.0
      %v857 = vsel %vm840, %v841, %v759
      %v858 = vsel %vm840, %v842, %v762
      %v859 = vsel %vm840, %v843, %v767
      %v860 = vsel %vm840, %v844, %v770
      %v861 = vsel %vm840, %v845, %v775
      %v862 = vsel %vm840, %v846, %v778
      %v863 = vsel %vm840, %v847, %v783
      %v864 = vsel %vm840, %v848, %v786
      %v865 = vsel %vm840, %v849, %v791
      %v866 = vsel %vm840, %v850, %v794
      %v867 = vsel %vm840, %v851, %v799
      %v868 = vsel %vm840, %v852, %v802
      %v869 = vsel %vm840, %v853, %v807
      %v870 = vsel %vm840, %v854, %v810
      %v871 = vsel %vm840, %v855, %v815
      %v872 = vsel %vm840, %v856, %v818
      %v873 = vsel %vm823, %v824, %v857
      %v874 = vsel %vm823, %v825, %v858
      %v875 = vsel %vm823, %v826, %v859
      %v876 = vsel %vm823, %v827, %v860
      %v877 = vsel %vm823, %v828, %v861
      %v878 = vsel %vm823, %v829, %v862
      %v879 = vsel %vm823, %v830, %v863
      %v880 = vsel %vm823, %v831, %v864
      %v881 = vsel %vm823, %v832, %v865
      %v882 = vsel %vm823, %v833, %v866
      %v883 = vsel %vm823, %v834, %v867
      %v884 = vsel %vm823, %v835, %v868
      %v885 = vsel %vm823, %v836, %v869
      %v886 = vsel %vm823, %v837, %v870
      %v887 = vsel %vm823, %v838, %v871
      %v888 = vsel %vm823, %v839, %v872
      %v889 = vpack.c.bf16 %v874, %v873
      %v890 = vpack.c.bf16 %v876, %v875
      %v891 = vpack.c.bf16 %v878, %v877
      %v892 = vpack.c.bf16 %v880, %v879
      %v893 = vpack.c.bf16 %v882, %v881
      %v894 = vpack.c.bf16 %v884, %v883
      %v895 = vpack.c.bf16 %v886, %v885
      %v896 = vpack.c.bf16 %v888, %v887
      %v905 = vunpack.c.l.b16 %v889
      %v906 = vunpack.c.h.b16 %v889
      %v907 = vunpack.c.l.b16 %v890
      %v908 = vunpack.c.h.b16 %v890
      %v909 = vunpack.c.l.b16 %v891
      %v910 = vunpack.c.h.b16 %v891
      %v911 = vunpack.c.l.b16 %v892
      %v912 = vunpack.c.h.b16 %v892
      %v913 = vunpack.c.l.b16 %v893
      %v914 = vunpack.c.h.b16 %v893
      %v915 = vunpack.c.l.b16 %v894
      %v916 = vunpack.c.h.b16 %v894
      %v917 = vunpack.c.l.b16 %v895
      %v918 = vunpack.c.h.b16 %v895
      %v919 = vunpack.c.l.b16 %v896
      %v920 = vunpack.c.h.b16 %v896
      %v921 = vpack.c.b16 %v905, %v905
      %v922 = vpack.c.b16 %v906, %v906
      %v923 = vpack.c.b16 %v907, %v907
      %v924 = vpack.c.b16 %v908, %v908
      %v925 = vpack.c.b16 %v909, %v909
      %v926 = vpack.c.b16 %v910, %v910
      %v927 = vpack.c.b16 %v911, %v911
      %v928 = vpack.c.b16 %v912, %v912
      %v929 = vpack.c.b16 %v913, %v913
      %v930 = vpack.c.b16 %v914, %v914
      %v931 = vpack.c.b16 %v915, %v915
      %v932 = vpack.c.b16 %v916, %v916
      %v933 = vpack.c.b16 %v917, %v917
      %v934 = vpack.c.b16 %v918, %v918
      %v935 = vpack.c.b16 %v919, %v919
      %v936 = vpack.c.b16 %v920, %v920
      %vm953 = vcmask 224256
      %954 = vst.msk [vmem:[%s280] sm:$0xf] %vm953, %v921
      %955 = vst.msk [vmem:[%s280 + $0x4] sm:$0xf] %vm953, %v922
      %956 = vst.msk [vmem:[%s280 + $0x8] sm:$0xf] %vm953, %v923
      %957 = vst.msk [vmem:[%s280 + $0xc] sm:$0xf] %vm953, %v924
      %958 = vst.msk [vmem:[%s280 + $0x10] sm:$0xf] %vm953, %v925
      %959 = vst.msk [vmem:[%s280 + $0x14] sm:$0xf] %vm953, %v926
      %960 = vst.msk [vmem:[%s280 + $0x18] sm:$0xf] %vm953, %v927
      %961 = vst.msk [vmem:[%s280 + $0x1c] sm:$0xf] %vm953, %v928
      %962 = vst.msk [vmem:[%s280 + $0x20] sm:$0xf] %vm953, %v929
      %963 = vst.msk [vmem:[%s280 + $0x24] sm:$0xf] %vm953, %v930
      %964 = vst.msk [vmem:[%s280 + $0x28] sm:$0xf] %vm953, %v931
      %965 = vst.msk [vmem:[%s280 + $0x2c] sm:$0xf] %vm953, %v932
      %966 = vst.msk [vmem:[%s280 + $0x30] sm:$0xf] %vm953, %v933
      %967 = vst.msk [vmem:[%s280 + $0x34] sm:$0xf] %vm953, %v934
      %968 = vst.msk [vmem:[%s280 + $0x38] sm:$0xf] %vm953, %v935
      %969 = vst.msk [vmem:[%s280 + $0x3c] sm:$0xf] %vm953, %v936
      %s970 = smul.u32 16, %s18
      %p971 = scmp.lt.s32.totalorder %s970, 31
      %s972 = scalar_select %p971, %s970, 31
      %s973 = smul.addr %s972, 4
      %s974 = scalar_lea.vmem %s7, %s973
      // Predicated region
      $region49: #{kkt_net_forward.1} parent=47 // pred_check
        %p975 = pneg %p188
      $region50: #{kkt_net_forward.1} parent=47 // pred_check_branch
        %977 = sbr.rel (%p975) target = $region52
      $region51: #{kkt_net_forward.1} parent=47 // pred_region
        %s978 = smul.u32 16, %s18
      $region52: #{kkt_net_forward.1} parent=47 // pred_fallthru
        _
    $region48: #{kkt_net_forward.1} parent=5 // pred_fallthru
      _
    %p979 = scmp.le.s32.totalorder 2, %s13
    // Predicated region
    $region53: #{kkt_net_forward.1} parent=5 // pred_check
      %p980 = pneg %p979
    $region54: #{kkt_net_forward.1} parent=5 // pred_check_branch
      %982 = sbr.rel (%p980) target = $region56
    $region55: #{kkt_net_forward.1} parent=5 // pred_region
      %s983 = ssub.s32 %s13, 2
      // Predicated region
      $region57: #{kkt_net_forward.1} parent=55 // pred_check
        %p984 = pneg %p194
      $region58: #{kkt_net_forward.1} parent=55 // pred_check_branch
        %986 = sbr.rel (%p984) target = $region60
      $region59: #{kkt_net_forward.1} parent=55 // pred_region
        %s987 = smul.u32 16, %s19
        %p988 = scmp.lt.s32.totalorder %s987, 31
        %s989 = scalar_select %p988, %s987, 31
        %s990 = smul.addr %s989, 4
        %s991 = scalar_lea.vmem %s7, %s990
      $region60: #{kkt_net_forward.1} parent=55 // pred_fallthru
        _
    $region56: #{kkt_net_forward.1} parent=5 // pred_fallthru
      _
  $region6: #{kkt_net_forward.1} parent=0 // loop_footer
    %s17 = sadd.s32 1, %s13
  $region7: #{kkt_net_forward.1} parent=0 // loop_footer_branch
    %12 = sbr.rel target = $region3
  $region8: #{kkt_net_forward.1} parent=0 // loop_exit
    _

</llo_original>
